<compile_context>
chip_gen: v5e
topology: v5e:2x2
jax: 0.10.0
libtpu: 0.0.40
codegen_flags: <defaults>
</compile_context>

<pallas_src>
import functools

import jax
import jax.numpy as jnp
from jax.experimental import pallas as pl
from jax.experimental.pallas import tpu as pltpu

LANE = 128      # f32 lane width
SUBLANE = 8     # f32 sublane width


def _round_up(x, m):
    return (x + m - 1) // m * m


# --------------------------------------------------------------------------
# Kernel
# --------------------------------------------------------------------------
def ngram_kernel(ids_ref, t_ref, b1_ref, w2_ref, b2_ref, o_ref, *,
                 context_size, vocab_size):
    # ids_ref : (Bt, ctx)        int32  token ids for this batch tile
    # t_ref   : (ctx, Vp, H)            folded emb @ W1[c] tables (resident)
    # b1_ref  : (1, H)
    # w2_ref  : (H, Vp)                 vocab padded to Vp (multiple of 128)
    # b2_ref  : (1, Vp)
    # o_ref   : (Bt, Vp)         f32    log-probs (padded lanes are junk)
    bt, vp = o_ref.shape

    # Small (1, Vp) iota; all compares broadcast against it (low vreg pressure).
    lane_iota = jax.lax.broadcasted_iota(jnp.int32, (1, vp), 1)
    ids = ids_ref[...]                                        # (Bt, ctx)

    # ---- fused embedding-gather + linear1: one lane-dense MXU dot per slot --
    # NOTE: ids >= vocab select an all-zero padded row (nn.Embedding would
    # raise); callers must pass in-range ids.
    acc = None
    for c in range(context_size):
        tok = ids[:, c:c + 1]                                 # (Bt, 1)
        one_hot = (lane_iota == tok).astype(t_ref.dtype)      # (Bt, Vp), exact
        contrib = jnp.dot(one_hot, t_ref[c],                  # (Bt,Vp)@(Vp,H)
                          preferred_element_type=jnp.float32)
        acc = contrib if acc is None else acc + contrib
    h = jnp.maximum(acc + b1_ref[...].astype(jnp.float32), 0.0)   # ReLU, f32

    # ---- linear2 ------------------------------------------------------------
    logits = jnp.dot(h.astype(w2_ref.dtype), w2_ref[...],
                     preferred_element_type=jnp.float32)
    logits = logits + b2_ref[...].astype(jnp.float32)
    # Mask padded vocab lanes so they cannot perturb max / sum-exp.
    # (-1e30, not -inf: keeps padded batch rows NaN-free.)
    logits = jnp.where(lane_iota < vocab_size, logits, jnp.float32(-1e30))

    # ---- log_softmax over the lane-dense vocab axis -------------------------
    m = jnp.max(logits, axis=1, keepdims=True)
    shifted = logits - m
    lse = jnp.log(jnp.sum(jnp.exp(shifted), axis=1, keepdims=True))
    o_ref[...] = (shifted - lse).astype(o_ref.dtype)


# --------------------------------------------------------------------------
# Parameter preparation (run ONCE at init/load time, not per forward call)
# --------------------------------------------------------------------------
def prepare_ngram_params(emb_table, w1, b1, w2, b2, *, param_dtype=jnp.float32):
    """Pad to TPU-friendly shapes and fold the embedding into linear1.

    emb_table: (vocab, emb_dim)   w1: (ctx*emb_dim, H)   b1: (H,) or (1, H)
    w2: (H, vocab)                b2: (vocab,) or (1, vocab)
    """
    vocab, emb_dim = emb_table.shape
    d, hidden = w1.shape
    ctx = d // emb_dim
    assert d == ctx * emb_dim
    assert w2.shape == (hidden, vocab)
    vp = _round_up(vocab, LANE)

    # T[c] = emb @ W1[c*E:(c+1)*E, :]  -> (ctx, Vp, H); padded vocab rows zero.
    w1_3d = w1.reshape(ctx, emb_dim, hidden).astype(jnp.float32)
    t = jnp.einsum('ve,ceh->cvh', emb_table.astype(jnp.float32), w1_3d)
    t_p = jnp.zeros((ctx, vp, hidden), jnp.float32).at[:, :vocab, :].set(t)

    w2_p = jnp.zeros((hidden, vp), jnp.float32).at[:, :vocab].set(
        w2.astype(jnp.float32))
    b2_p = jnp.zeros((1, vp), jnp.float32).at[:, :vocab].set(
        b2.reshape(1, vocab).astype(jnp.float32))
    b1_p = b1.reshape(1, hidden).astype(jnp.float32)

    return dict(
        t=t_p.astype(param_dtype),          # (ctx, Vp, H)
        b1=b1_p,                            # (1, H)   kept f32 (added in f32)
        w2=w2_p.astype(param_dtype),        # (H, Vp)
        b2=b2_p,                            # (1, Vp)  kept f32
        vocab=vocab, context_size=ctx, hidden=hidden, vp=vp)


# --------------------------------------------------------------------------
# Forward wrapper
# --------------------------------------------------------------------------
def _choose_batch_tile(b, block_b):
    bt = min(block_b, _round_up(b, SUBLANE))
    if _round_up(b, bt) // bt < 2 and b > SUBLANE:
        # Ensure >= 2 grid steps so the "parallel" axis can shard across
        # v7x's two TensorCores (irrelevant on single-TC v5e/v6e).
        bt = _round_up(pl.cdiv(b, 2), SUBLANE)
    return bt, _round_up(b, bt)


def _vmem_limit_bytes(bt, ctx, vp, hidden, w_itemsize):
    resident = (ctx * vp * hidden + hidden * vp + hidden + vp) * w_itemsize
    streamed = 2 * bt * ctx * 4 + 2 * bt * vp * 4   # ids + out, double-buffered
    limit = int(1.5 * (resident + streamed)) + (2 << 20)
    return min(max(limit, 16 << 20), 64 << 20)


def ngram_forward(token_ids, params, *, block_b=256):
    """NGram LM forward.

    token_ids: (ctx,) int32  -> (1, vocab)   [original PyTorch shape]
               (B, ctx)      -> (B, vocab)
    """
    if token_ids.ndim == 1:
        token_ids = token_ids[None, :]
    token_ids = token_ids.astype(jnp.int32)
    b, ctx = token_ids.shape
    assert ctx == params['context_size']
    vocab, vp, hidden = params['vocab'], params['vp'], params['hidden']

    bt, bp = _choose_batch_tile(b, block_b)
    ids_p = token_ids if bp == b else (
        jnp.zeros((bp, ctx), jnp.int32).at[:b].set(token_ids))

    kernel = functools.partial(ngram_kernel, context_size=ctx, vocab_size=vocab)
    w_itemsize = jnp.dtype(params['t'].dtype).itemsize
    vmem_limit = _vmem_limit_bytes(bt, ctx, vp, hidden, w_itemsize)

    def resident(shape):
        # Constant index_map + single buffer: DMA'd once, stays in VMEM.
        return pl.BlockSpec(shape, lambda i: (0,) * len(shape),
                            pipeline_mode=pl.Buffered(1))

    out = pl.pallas_call(
        kernel,
        out_shape=jax.ShapeDtypeStruct((bp, vp), jnp.float32),
        grid_spec=pltpu.PrefetchScalarGridSpec(
            num_scalar_prefetch=0,
            grid=(bp // bt,),
            in_specs=[
                pl.BlockSpec((bt, ctx), lambda i: (i, 0)),   # ids: move w/ batch
                resident((ctx, vp, hidden)),                 # folded emb@W1
                resident((1, hidden)),                       # b1
                resident((hidden, vp)),                      # W2
                resident((1, vp)),                           # b2
            ],
            out_specs=pl.BlockSpec((bt, vp), lambda i: (i, 0)),
        ),
        compiler_params=pltpu.CompilerParams(
            dimension_semantics=("parallel",),               # megacore split
            vmem_limit_bytes=vmem_limit),
    )(ids_p, params['t'], params['b1'], params['w2'], params['b2'])

    return out[:b, :vocab]


# --------------------------------------------------------------------------
# Demo / correctness check
# --------------------------------------------------------------------------
if __name__ == "__main__":
    VOCAB_SIZE = 20
    EMBEDDING_DIM = 10
    CONTEXT_SIZE = 2
    HIDDEN = 128
    BATCH = 16                     # 2 batch tiles of 8 -> 2 "parallel" steps
    D = CONTEXT_SIZE * EMBEDDING_DIM

    key = jax.random.PRNGKey(0)
    k_emb, k_w1, k_b1, k_w2, k_b2, k_in = jax.random.split(key, 6)

    # Deterministic parameter init (shapes match nn.Embedding / nn.Linear).
    emb_table = jax.random.normal(k_emb, (VOCAB_SIZE, EMBEDDING_DIM), jnp.float32)
    w1 = jax.random.normal(k_w1, (D, HIDDEN), jnp.float32) * (1.0 / jnp.sqrt(D))
    b1 = jax.random.normal(k_b1, (1, HIDDEN), jnp.float32) * 0.01
    w2 = jax.random.normal(k_w2, (HIDDEN, VOCAB_SIZE), jnp.float32) * (1.0 / jnp.sqrt(HIDDEN))
    b2 = jax.random.normal(k_b2, (1, VOCAB_SIZE), jnp.float32) * 0.01

    # Batch of n-gram contexts (in-range ids; see OOB note in the kernel).
    token_ids = jax.random.randint(
        k_in, (BATCH, CONTEXT_SIZE), 0, VOCAB_SIZE, jnp.int32)

    # Pad + fold once (parameter-init time), then run the forward.
    params = prepare_ngram_params(emb_table, w1, b1, w2, b2)
    out = jax.block_until_ready(ngram_forward(token_ids, params))

    # Plain-JAX reference (unfolded, matches PyTorch forward).
    x_ref = jnp.take(emb_table, token_ids, axis=0).reshape(BATCH, -1)
    h_ref = jnp.maximum(x_ref @ w1 + b1, 0.0)
    logits_ref = h_ref @ w2 + b2
    ref = jax.nn.log_softmax(logits_ref, axis=1)
    assert out.shape == (BATCH, VOCAB_SIZE)
    assert jnp.allclose(out, ref, atol=1e-4, rtol=1e-4), "batched mismatch vs reference"

    # Original single-context semantics: (ctx,) -> (1, vocab).
    out1 = jax.block_until_ready(ngram_forward(token_ids[0], params))
    assert out1.shape == (1, VOCAB_SIZE)
    assert jnp.allclose(out1, ref[:1], atol=1e-4, rtol=1e-4), "single-context mismatch"

    # bf16 weights (halved VMEM residency / DMA, ~2x MXU throughput): looser tol.
    params_bf16 = prepare_ngram_params(emb_table, w1, b1, w2, b2,
                                       param_dtype=jnp.bfloat16)
    out_bf16 = jax.block_until_ready(ngram_forward(token_ids, params_bf16))
    assert jnp.allclose(out_bf16, ref, atol=1e-1, rtol=1e-1), "bf16 mismatch"

    print("KERNEL_OK")
</pallas_src>

<mosaic_0001>
module attributes {stable_mosaic.version = 11 : i64} {
  func.func @ngram_kernel(%arg0: i32, %arg1: memref<8x2xi32, #tpu.memory_space<vmem>>, %arg2: memref<2x128x128xf32, #tpu.memory_space<vmem>>, %arg3: memref<1x128xf32, #tpu.memory_space<vmem>>, %arg4: memref<128x128xf32, #tpu.memory_space<vmem>>, %arg5: memref<1x128xf32, #tpu.memory_space<vmem>>, %arg6: memref<8x128xf32, #tpu.memory_space<vmem>>) attributes {dimension_semantics = [#tpu.dimension_semantics<parallel>], iteration_bounds = array<i64: 2>, scalar_prefetch = 0 : i64, scratch_operands = 0 : i64, tpu.core_type = #tpu.core_type<tc>, window_params = [{transform_indices = @transform_0, window_bounds = array<i64: 8, 2>}, {pipeline_mode = #tpu.pipeline_mode<synchronous>, transform_indices = @transform_1, window_bounds = array<i64: 2, 128, 128>}, {pipeline_mode = #tpu.pipeline_mode<synchronous>, transform_indices = @transform_2, window_bounds = array<i64: 1, 128>}, {pipeline_mode = #tpu.pipeline_mode<synchronous>, transform_indices = @transform_3, window_bounds = array<i64: 128, 128>}, {pipeline_mode = #tpu.pipeline_mode<synchronous>, transform_indices = @transform_4, window_bounds = array<i64: 1, 128>}, {transform_indices = @transform_5, window_bounds = array<i64: 8, 128>}]} {
    %0 = tpu.iota {dimensions = array<i32: 1>} : vector<1x128xi32>
    %c0 = arith.constant 0 : index
    %c0_0 = arith.constant 0 : index
    %1 = vector.load %arg1[%c0, %c0_0] : memref<8x2xi32, #tpu.memory_space<vmem>>, vector<8x2xi32>
    %2 = vector.extract_strided_slice %1 {offsets = [0, 0], sizes = [8, 1], strides = [1, 1]} : vector<8x2xi32> to vector<8x1xi32>
    %3 = vector.broadcast %0 : vector<1x128xi32> to vector<8x128xi32>
    %4 = vector.broadcast %2 : vector<8x1xi32> to vector<8x128xi32>
    %5 = arith.cmpi eq, %3, %4 : vector<8x128xi32>
    %6 = arith.extui %5 : vector<8x128xi1> to vector<8x128xi32>
    %7 = arith.sitofp %6 : vector<8x128xi32> to vector<8x128xf32>
    %c0_1 = arith.constant 0 : index
    %c0_2 = arith.constant 0 : index
    %c0_3 = arith.constant 0 : index
    %8 = vector.load %arg2[%c0_1, %c0_2, %c0_3] : memref<2x128x128xf32, #tpu.memory_space<vmem>>, vector<1x128x128xf32>
    %9 = vector.shape_cast %8 : vector<1x128x128xf32> to vector<128x128xf32>
    %cst = arith.constant dense<0.000000e+00> : vector<8x128xf32>
    %10 = tpu.matmul %7, %9, %cst {dimension_numbers = #tpu.dot_dimension_numbers<[1], [0], [0], [1], [0, 0, 1, 1], [], []>} : vector<8x128xf32>, vector<128x128xf32>, vector<8x128xf32> -> vector<8x128xf32>
    %11 = vector.extract_strided_slice %1 {offsets = [0, 1], sizes = [8, 1], strides = [1, 1]} : vector<8x2xi32> to vector<8x1xi32>
    %12 = vector.broadcast %0 : vector<1x128xi32> to vector<8x128xi32>
    %13 = vector.broadcast %11 : vector<8x1xi32> to vector<8x128xi32>
    %14 = arith.cmpi eq, %12, %13 : vector<8x128xi32>
    %15 = arith.extui %14 : vector<8x128xi1> to vector<8x128xi32>
    %16 = arith.sitofp %15 : vector<8x128xi32> to vector<8x128xf32>
    %c1 = arith.constant 1 : index
    %c0_4 = arith.constant 0 : index
    %c0_5 = arith.constant 0 : index
    %17 = vector.load %arg2[%c1, %c0_4, %c0_5] : memref<2x128x128xf32, #tpu.memory_space<vmem>>, vector<1x128x128xf32>
    %18 = vector.shape_cast %17 : vector<1x128x128xf32> to vector<128x128xf32>
    %cst_6 = arith.constant dense<0.000000e+00> : vector<8x128xf32>
    %19 = tpu.matmul %16, %18, %cst_6 {dimension_numbers = #tpu.dot_dimension_numbers<[1], [0], [0], [1], [0, 0, 1, 1], [], []>} : vector<8x128xf32>, vector<128x128xf32>, vector<8x128xf32> -> vector<8x128xf32>
    %20 = arith.addf %10, %19 : vector<8x128xf32>
    %c0_7 = arith.constant 0 : index
    %c0_8 = arith.constant 0 : index
    %21 = vector.load %arg3[%c0_7, %c0_8] : memref<1x128xf32, #tpu.memory_space<vmem>>, vector<1x128xf32>
    %22 = vector.broadcast %21 : vector<1x128xf32> to vector<8x128xf32>
    %23 = arith.addf %20, %22 : vector<8x128xf32>
    %cst_9 = arith.constant 0.000000e+00 : f32
    %24 = vector.broadcast %cst_9 : f32 to vector<8x128xf32>
    %25 = arith.maximumf %23, %24 : vector<8x128xf32>
    %c0_10 = arith.constant 0 : index
    %c0_11 = arith.constant 0 : index
    %26 = vector.load %arg4[%c0_10, %c0_11] : memref<128x128xf32, #tpu.memory_space<vmem>>, vector<128x128xf32>
    %cst_12 = arith.constant dense<0.000000e+00> : vector<8x128xf32>
    %27 = tpu.matmul %25, %26, %cst_12 {dimension_numbers = #tpu.dot_dimension_numbers<[1], [0], [0], [1], [0, 0, 1, 1], [], []>} : vector<8x128xf32>, vector<128x128xf32>, vector<8x128xf32> -> vector<8x128xf32>
    %c0_13 = arith.constant 0 : index
    %c0_14 = arith.constant 0 : index
    %28 = vector.load %arg5[%c0_13, %c0_14] : memref<1x128xf32, #tpu.memory_space<vmem>>, vector<1x128xf32>
    %29 = vector.broadcast %28 : vector<1x128xf32> to vector<8x128xf32>
    %30 = arith.addf %27, %29 : vector<8x128xf32>
    %c20_i32 = arith.constant 20 : i32
    %31 = vector.broadcast %c20_i32 : i32 to vector<1x128xi32>
    %32 = arith.cmpi slt, %0, %31 : vector<1x128xi32>
    %cst_15 = arith.constant -1.000000e+30 : f32
    %33 = vector.shape_cast %32 : vector<1x128xi1> to vector<1x128xi1>
    %34 = vector.broadcast %33 : vector<1x128xi1> to vector<8x128xi1>
    %35 = vector.broadcast %cst_15 : f32 to vector<8x128xf32>
    %36 = arith.select %34, %30, %35 : vector<8x128xi1>, vector<8x128xf32>
    %cst_16 = arith.constant dense<0xFF800000> : vector<8xf32>
    %37 = vector.multi_reduction <maximumf>, %36, %cst_16 [1] : vector<8x128xf32> to vector<8xf32>
    %38 = vector.shape_cast %37 : vector<8xf32> to vector<8x1xf32>
    %39 = vector.broadcast %38 : vector<8x1xf32> to vector<8x128xf32>
    %40 = arith.subf %36, %39 : vector<8x128xf32>
    %41 = math.exp %40 : vector<8x128xf32>
    %cst_17 = arith.constant dense<0.000000e+00> : vector<8xf32>
    %42 = vector.multi_reduction <add>, %41, %cst_17 [1] : vector<8x128xf32> to vector<8xf32>
    %43 = vector.shape_cast %42 : vector<8xf32> to vector<8x1xf32>
    %44 = math.log %43 : vector<8x1xf32>
    %45 = vector.broadcast %44 : vector<8x1xf32> to vector<8x128xf32>
    %46 = arith.subf %40, %45 : vector<8x128xf32>
    %c0_18 = arith.constant 0 : index
    %c0_19 = arith.constant 0 : index
    %47 = vector.load %arg6[%c0_18, %c0_19] : memref<8x128xf32, #tpu.memory_space<vmem>>, vector<8x128xf32>
    tpu.vector_store %arg6[%c0_18, %c0_19], %46 {strides = array<i32>} : memref<8x128xf32, #tpu.memory_space<vmem>>, vector<8x128xf32>,
    return
  }
  func.func @transform_0(%arg0: i32) -> (i32, i32) {
    %c0_i32 = arith.constant 0 : i32
    %c0_i32_0 = arith.constant 0 : i32
    return %arg0, %c0_i32 : i32, i32
  }
  func.func @transform_1(%arg0: i32) -> (i32, i32, i32) {
    %c0_i32 = arith.constant 0 : i32
    %c0_i32_0 = arith.constant 0 : i32
    %c0_i32_1 = arith.constant 0 : i32
    %c0_i32_2 = arith.constant 0 : i32
    return %c0_i32, %c0_i32_0, %c0_i32_1 : i32, i32, i32
  }
  func.func @transform_2(%arg0: i32) -> (i32, i32) {
    %c0_i32 = arith.constant 0 : i32
    %c0_i32_0 = arith.constant 0 : i32
    %c0_i32_1 = arith.constant 0 : i32
    return %c0_i32, %c0_i32_0 : i32, i32
  }
  func.func @transform_3(%arg0: i32) -> (i32, i32) {
    %c0_i32 = arith.constant 0 : i32
    %c0_i32_0 = arith.constant 0 : i32
    %c0_i32_1 = arith.constant 0 : i32
    return %c0_i32, %c0_i32_0 : i32, i32
  }
  func.func @transform_4(%arg0: i32) -> (i32, i32) {
    %c0_i32 = arith.constant 0 : i32
    %c0_i32_0 = arith.constant 0 : i32
    %c0_i32_1 = arith.constant 0 : i32
    return %c0_i32, %c0_i32_0 : i32, i32
  }
  func.func @transform_5(%arg0: i32) -> (i32, i32) {
    %c0_i32 = arith.constant 0 : i32
    %c0_i32_0 = arith.constant 0 : i32
    return %arg0, %c0_i32 : i32, i32
  }
}

</mosaic_0001>

<llo_original>
// kernel: tpu_custom_call.1
$region0: #{tpu_custom_call.1}
  #allocation0 [shape = 'u32[]', space=smem, size = 0x4, offset = 0x4, fixed_abs, tag = 'smem constant byte address 0x4 - core index']
  #allocation1 [shape = 'u32[72,128]{1,0:T(1,128)}', space=vmem, size = 0x9000, scoped, tag = 'internal scratch']
  %s0 = inlined_call_operand.vmem [shape: s32[16,2], index: 0, kind: input, shape index: {}]
  %s1 = inlined_call_operand.hbm [shape: f32[2,128,128], index: 1, kind: input, shape index: {}]
  %s2 = inlined_call_operand.vmem [shape: f32[1,128], index: 2, kind: input, shape index: {}]
  %s3 = inlined_call_operand.hbm [shape: f32[128,128], index: 3, kind: input, shape index: {}]
  %s4 = inlined_call_operand.vmem [shape: f32[1,128], index: 4, kind: input, shape index: {}]
  %s5 = inlined_call_operand.hbm [shape: f32[16,128], index: 5, kind: output, shape index: {}]
  %s6 = sld [smem:[#allocation0]]
  $region61: #{tpu_custom_call.1} parent=0
    _
  %s8 = ssub.s32 1, %s6
  %s9 = scalar_select 0, %s8, %s6
  $region1: #{tpu_custom_call.1} parent=0
    #allocation2 [shape = 'u8[131072]{0}', space=vmem, size = 0x20000, scoped, tag = 'input window, operand 1, single buffered']
    #allocation3 [shape = 's32[2]{0}', space=sflag, size = 0x8, scoped, tag = 'scoped memory for tpu_custom_call.1']
    #allocation4 [shape = 's32[2]{0}', space=sflag, size = 0x8, scoped, tag = 'scoped memory for tpu_custom_call.1']
    #allocation5 [shape = 'u8[65536]{0}', space=vmem, size = 0x10000, scoped, tag = 'input window, operand 3, single buffered']
    #allocation6 [shape = 's32[1]{0}', space=sflag, size = 0x4, scoped, tag = 'scoped memory for tpu_custom_call.1']
    #allocation7 [shape = 'u8[8192]{0}', space=vmem, size = 0x2000, scoped, tag = 'output window, operand 0']
    %10 = vsyncpa [#allocation3], 0
    %11 = vsyncpa [#allocation6], 0
    %12 = vsyncpa [#allocation4], 0
    %s13 = scalar_lea.sflag [#allocation4], 1
    %14 = vsyncpa %s13, 0
    loop: start=0, step=1, limit=4
    $region2: #{tpu_custom_call.1} parent=1 // loop_pre_header
      _
    $region3: #{tpu_custom_call.1} parent=1 // loop_header
      %s16 = sphi 0, %s20
      %p17 = scmp.ge.s32.totalorder %s16, 4
      %s26 = sphi 0, %s28
      %s29 = sphi 0, %s26
      %s30 = sphi 0, %s29
      %s46 = sphi 0, %s30
      %s50 = sphi 0, %s50
      %s52 = sphi 0, %s50
      %s53 = sphi 0, %s52
      %s67 = sphi 0, %s53
      %s71 = sphi 0, %s71
      %s73 = sphi 0, %s71
      %s74 = sphi 0, %s73
      %s88 = sphi 0, %s74
      %s92 = sphi 0, %s92
      %s94 = sphi 0, %s92
      %s95 = sphi 0, %s94
      %s109 = sphi 0, %s95
      %s113 = sphi 0, %s113
      %s115 = sphi 0, %s113
      %s116 = sphi 0, %s115
      %s130 = sphi 0, %s116
      %s136 = sphi 0, %s138
      %s139 = sphi 0, %s136
      %s140 = sphi 0, %s139
      %s156 = sphi 0, %s140
    $region4: #{tpu_custom_call.1} parent=1 // loop_header_branch
      %19 = sbr.rel (%p17) target = $region8
    $region5: #{tpu_custom_call.1} parent=1 // loop_body
      %s21 = ssub.s32 %s16, 1
      %s22 = ssub.s32 %s16, 2
      %s23 = sadd.s32 %s16, 1
      %s24 = ssub.s32 %s16, %s23
      %p25 = scmp.eq.s32.totalorder %s24, 0
      %s27 = sadd.s32 %s26, 1
      %s28 = scalar_select %p25, %s26, %s27
      %p31 = pneg %p25
      %p32 = scmp.eq.s32.totalorder %s16, 1
      %p33 = por %p31, %p32
      %p34 = scmp.ne.s32.totalorder %s26, %s29
      %p35 = scmp.eq.s32.totalorder %s16, 0
      %p36 = por %p34, %p35
      %p37 = scmp.ne.s32.totalorder %s26, %s29
      %p38 = scmp.eq.s32.totalorder %s21, 1
      %p39 = por %p37, %p38
      %p40 = scmp.ne.s32.totalorder %s29, %s30
      %p41 = scmp.eq.s32.totalorder %s21, 0
      %p42 = por %p40, %p41
      %p43 = scmp.ne.s32.totalorder %s29, %s30
      %p44 = scmp.eq.s32.totalorder %s22, 1
      %p45 = por %p43, %p44
      %p47 = scmp.ne.s32.totalorder %s30, %s46
      %p48 = scmp.eq.s32.totalorder %s22, 0
      %p49 = por %p47, %p48
      %s51 = sadd.s32 %s50, 1
      %p54 = scmp.eq.s32.totalorder %s16, 1
      %p55 = scmp.ne.s32.totalorder %s50, %s52
      %p56 = scmp.eq.s32.totalorder %s16, 0
      %p57 = por %p55, %p56
      %p58 = scmp.ne.s32.totalorder %s50, %s52
      %p59 = scmp.eq.s32.totalorder %s21, 1
      %p60 = por %p58, %p59
      %p61 = scmp.ne.s32.totalorder %s52, %s53
      %p62 = scmp.eq.s32.totalorder %s21, 0
      %p63 = por %p61, %p62
      %p64 = scmp.ne.s32.totalorder %s52, %s53
      %p65 = scmp.eq.s32.totalorder %s22, 1
      %p66 = por %p64, %p65
      %p68 = scmp.ne.s32.totalorder %s53, %s67
      %p69 = scmp.eq.s32.totalorder %s22, 0
      %p70 = por %p68, %p69
      %s72 = sadd.s32 %s71, 1
      %p75 = scmp.eq.s32.totalorder %s16, 1
      %p76 = scmp.ne.s32.totalorder %s71, %s73
      %p77 = scmp.eq.s32.totalorder %s16, 0
      %p78 = por %p76, %p77
      %p79 = scmp.ne.s32.totalorder %s71, %s73
      %p80 = scmp.eq.s32.totalorder %s21, 1
      %p81 = por %p79, %p80
      %p82 = scmp.ne.s32.totalorder %s73, %s74
      %p83 = scmp.eq.s32.totalorder %s21, 0
      %p84 = por %p82, %p83
      %p85 = scmp.ne.s32.totalorder %s73, %s74
      %p86 = scmp.eq.s32.totalorder %s22, 1
      %p87 = por %p85, %p86
      %p89 = scmp.ne.s32.totalorder %s74, %s88
      %p90 = scmp.eq.s32.totalorder %s22, 0
      %p91 = por %p89, %p90
      %s93 = sadd.s32 %s92, 1
      %p96 = scmp.eq.s32.totalorder %s16, 1
      %p97 = scmp.ne.s32.totalorder %s92, %s94
      %p98 = scmp.eq.s32.totalorder %s16, 0
      %p99 = por %p97, %p98
      %p100 = scmp.ne.s32.totalorder %s92, %s94
      %p101 = scmp.eq.s32.totalorder %s21, 1
      %p102 = por %p100, %p101
      %p103 = scmp.ne.s32.totalorder %s94, %s95
      %p104 = scmp.eq.s32.totalorder %s21, 0
      %p105 = por %p103, %p104
      %p106 = scmp.ne.s32.totalorder %s94, %s95
      %p107 = scmp.eq.s32.totalorder %s22, 1
      %p108 = por %p106, %p107
      %p110 = scmp.ne.s32.totalorder %s95, %s109
      %p111 = scmp.eq.s32.totalorder %s22, 0
      %p112 = por %p110, %p111
      %s114 = sadd.s32 %s113, 1
      %p117 = scmp.eq.s32.totalorder %s16, 1
      %p118 = scmp.ne.s32.totalorder %s113, %s115
      %p119 = scmp.eq.s32.totalorder %s16, 0
      %p120 = por %p118, %p119
      %p121 = scmp.ne.s32.totalorder %s113, %s115
      %p122 = scmp.eq.s32.totalorder %s21, 1
      %p123 = por %p121, %p122
      %p124 = scmp.ne.s32.totalorder %s115, %s116
      %p125 = scmp.eq.s32.totalorder %s21, 0
      %p126 = por %p124, %p125
      %p127 = scmp.ne.s32.totalorder %s115, %s116
      %p128 = scmp.eq.s32.totalorder %s22, 1
      %p129 = por %p127, %p128
      %p131 = scmp.ne.s32.totalorder %s116, %s130
      %p132 = scmp.eq.s32.totalorder %s22, 0
      %p133 = por %p131, %p132
      %s134 = ssub.s32 %s16, %s23
      %p135 = scmp.eq.s32.totalorder %s134, 0
      %s137 = sadd.s32 %s136, 1
      %s138 = scalar_select %p135, %s136, %s137
      %p141 = pneg %p135
      %p142 = scmp.eq.s32.totalorder %s16, 1
      %p143 = por %p141, %p142
      %p144 = scmp.ne.s32.totalorder %s136, %s139
      %p145 = scmp.eq.s32.totalorder %s16, 0
      %p146 = por %p144, %p145
      %p147 = scmp.ne.s32.totalorder %s136, %s139
      %p148 = scmp.eq.s32.totalorder %s21, 1
      %p149 = por %p147, %p148
      %p150 = scmp.ne.s32.totalorder %s139, %s140
      %p151 = scmp.eq.s32.totalorder %s21, 0
      %p152 = por %p150, %p151
      %p153 = scmp.ne.s32.totalorder %s139, %s140
      %p154 = scmp.eq.s32.totalorder %s22, 1
      %p155 = por %p153, %p154
      %p157 = scmp.ne.s32.totalorder %s140, %s156
      %p158 = scmp.eq.s32.totalorder %s22, 0
      %p159 = por %p157, %p158
      %p160 = scmp.le.s32.totalorder 1, %s16
      %p161 = scmp.lt.s32.totalorder %s16, 3
      %p162 = pnand %p160, %p161
      %p163 = pneg %p162
      // Predicated region
      $region9: #{tpu_custom_call.1} parent=5 // pred_check
        _
      $region10: #{tpu_custom_call.1} parent=5 // pred_check_branch
        %165 = sbr.rel (%p162) target = $region12
      $region11: #{tpu_custom_call.1} parent=5 // pred_region
        %s166 = ssub.s32 %s16, 1
        // Predicated region
        $region13: #{tpu_custom_call.1} parent=11 // pred_check
          %p167 = pneg %p63
        $region14: #{tpu_custom_call.1} parent=11 // pred_check_branch
          %169 = sbr.rel (%p167) target = $region16
        $region15: #{tpu_custom_call.1} parent=11 // pred_region
          %171 = vsyncadd [#allocation3], 0
          %s172 = sshll.u32 %s1, 4
          %s173 = int_to_ptr.hbm [resolvable:$true] %s172
          %s174 = sshll.u32 [#allocation2], 4
          %s175 = int_to_ptr.vmem [resolvable:$true] %s174
          %180 = dma.hbm_to_vmem [thread:$0]  %s173, 4096, %s175, [#allocation3], 128, 128, 8
        $region16: #{tpu_custom_call.1} parent=11 // pred_fallthru
          _
        // Predicated region
        $region17: #{tpu_custom_call.1} parent=11 // pred_check
          %p181 = pneg %p84
        $region18: #{tpu_custom_call.1} parent=11 // pred_check_branch
          %183 = sbr.rel (%p181) target = $region20
        $region19: #{tpu_custom_call.1} parent=11 // pred_region
          _
        $region20: #{tpu_custom_call.1} parent=11 // pred_fallthru
          _
        // Predicated region
        $region21: #{tpu_custom_call.1} parent=11 // pred_check
          %p184 = pneg %p105
        $region22: #{tpu_custom_call.1} parent=11 // pred_check_branch
          %186 = sbr.rel (%p184) target = $region24
        $region23: #{tpu_custom_call.1} parent=11 // pred_region
          %188 = vsyncadd [#allocation6], 0
          %s189 = sshll.u32 %s3, 4
          %s190 = int_to_ptr.hbm [resolvable:$true] %s189
          %s191 = sshll.u32 [#allocation5], 4
          %s192 = int_to_ptr.vmem [resolvable:$true] %s191
          %197 = dma.hbm_to_vmem [thread:$0]  %s190, 2048, %s192, [#allocation6], 128, 128, 8
        $region24: #{tpu_custom_call.1} parent=11 // pred_fallthru
          _
        // Predicated region
        $region25: #{tpu_custom_call.1} parent=11 // pred_check
          %p198 = pneg %p126
        $region26: #{tpu_custom_call.1} parent=11 // pred_check_branch
          %200 = sbr.rel (%p198) target = $region28
        $region27: #{tpu_custom_call.1} parent=11 // pred_region
          _
        $region28: #{tpu_custom_call.1} parent=11 // pred_fallthru
          _
      $region12: #{tpu_custom_call.1} parent=5 // pred_fallthru
        _
      %p201 = scmp.lt.s32.totalorder %s16, 2
      // Predicated region
      $region29: #{tpu_custom_call.1} parent=5 // pred_check
        %p202 = pneg %p201
      $region30: #{tpu_custom_call.1} parent=5 // pred_check_branch
        %204 = sbr.rel (%p202) target = $region32
      $region31: #{tpu_custom_call.1} parent=5 // pred_region
        // Predicated region
        $region33: #{tpu_custom_call.1} parent=31 // pred_check
          %p205 = pneg %p36
        $region34: #{tpu_custom_call.1} parent=31 // pred_check_branch
          %207 = sbr.rel (%p205) target = $region36
        $region35: #{tpu_custom_call.1} parent=31 // pred_region
          %p208 = scmp.lt.s32.totalorder %s16, 1
          %s209 = scalar_select %p208, %s16, 1
          %s210 = smul.addr %s209, 8
          %s211 = scalar_lea.vmem %s0, %s210
        $region36: #{tpu_custom_call.1} parent=31 // pred_fallthru
          _
      $region32: #{tpu_custom_call.1} parent=5 // pred_fallthru
        _
      %p212 = scmp.le.s32.totalorder 1, %s16
      %p213 = scmp.lt.s32.totalorder %s16, 3
      %p214 = pnand %p212, %p213
      %p215 = pneg %p214
      // Predicated region
      $region37: #{tpu_custom_call.1} parent=5 // pred_check
        _
      $region38: #{tpu_custom_call.1} parent=5 // pred_check_branch
        %217 = sbr.rel (%p214) target = $region40
      $region39: #{tpu_custom_call.1} parent=5 // pred_region
        %s218 = ssub.s32 %s16, 1
        // Predicated region
        $region41: #{tpu_custom_call.1} parent=39 // pred_check
          %p219 = pneg %p63
        $region42: #{tpu_custom_call.1} parent=39 // pred_check_branch
          %221 = sbr.rel (%p219) target = $region44
        $region43: #{tpu_custom_call.1} parent=39 // pred_region
          %223 = dma.done [#allocation3], 4096
        $region44: #{tpu_custom_call.1} parent=39 // pred_fallthru
          _
        // Predicated region
        $region45: #{tpu_custom_call.1} parent=39 // pred_check
          %p224 = pneg %p105
        $region46: #{tpu_custom_call.1} parent=39 // pred_check_branch
          %226 = sbr.rel (%p224) target = $region48
        $region47: #{tpu_custom_call.1} parent=39 // pred_region
          %228 = dma.done [#allocation6], 2048
        $region48: #{tpu_custom_call.1} parent=39 // pred_fallthru
          _
        %p229 = scmp.lt.s32.totalorder %s21, 1
        %s230 = scalar_select %p229, %s21, 1
        %s231 = smul.addr %s230, 8
        %s232 = scalar_lea.vmem %s0, %s231
        %p233 = pneg %p42
        %p234 = pneg %p39
        %p235 = pneg %p63
        %p236 = pneg %p60
        %p237 = pneg %p84
        %p238 = pneg %p81
        %p239 = pneg %p105
        %p240 = pneg %p102
        %p241 = pneg %p126
        %p242 = pneg %p123
        %p243 = pneg %p152
        %p244 = pneg %p149
        %s245 = sand.u32 %s139, 1
        %s246 = scalar_lea.sflag [#allocation4], %s245
        %s247 = sand.u32 %s139, 1
        %s248 = smul.addr %s247, 8
        %s249 = scalar_lea.vmem [#allocation7], %s248
        %p250 = scmp.lt.s32.totalorder %s21, 1
        %s251 = scalar_select %p250, %s21, 1
        %s252 = smul.addr %s251, 8
        %s253 = scalar_lea.vmem %s0, %s252
        %v254 = vlaneseq
        %v255 = vand.u32 %v254, 127
        %v256 = vld [vmem:[%s253] sm:$0xff]
        %257 = vset.pattern.permute.xlu0 0
        %258 = vperm.xlu0 %257, %v256
        %v259 = vpop.permute.xlu0 %258
        %vm260 = vcmp.eq.s32.totalorder %v255, %v259
        %v261 = vsel %vm260, 1, 0
        %v262 = vcvt.s32.f32 %v261
        %v263 = vld [vmem:[#allocation2] sm:$0xff]
        %v264 = vld [vmem:[#allocation2 + $0x8] sm:$0xff]
        %v265 = vld [vmem:[#allocation2 + $0x10] sm:$0xff]
        %v266 = vld [vmem:[#allocation2 + $0x18] sm:$0xff]
        %v267 = vld [vmem:[#allocation2 + $0x20] sm:$0xff]
        %v268 = vld [vmem:[#allocation2 + $0x28] sm:$0xff]
        %v269 = vld [vmem:[#allocation2 + $0x30] sm:$0xff]
        %v270 = vld [vmem:[#allocation2 + $0x38] sm:$0xff]
        %v271 = vld [vmem:[#allocation2 + $0x40] sm:$0xff]
        %v272 = vld [vmem:[#allocation2 + $0x48] sm:$0xff]
        %v273 = vld [vmem:[#allocation2 + $0x50] sm:$0xff]
        %v274 = vld [vmem:[#allocation2 + $0x58] sm:$0xff]
        %v275 = vld [vmem:[#allocation2 + $0x60] sm:$0xff]
        %v276 = vld [vmem:[#allocation2 + $0x68] sm:$0xff]
        %v277 = vld [vmem:[#allocation2 + $0x70] sm:$0xff]
        %v278 = vld [vmem:[#allocation2 + $0x78] sm:$0xff]
        %279 = vset.pattern.permute.xlu0 1
        %280 = vperm.xlu0 %279, %v256
        %v281 = vpop.permute.xlu0 %280
        %vm282 = vcmp.eq.s32.totalorder %v255, %v281
        %v283 = vsel %vm282, 1, 0
        %v284 = vcvt.s32.f32 %v283
        %s285 = scalar_lea.vmem [#allocation2], 128
        %v286 = vld [vmem:[%s285] sm:$0xff]
        %v287 = vld [vmem:[%s285 + $0x8] sm:$0xff]
        %v288 = vld [vmem:[%s285 + $0x10] sm:$0xff]
        %v289 = vld [vmem:[%s285 + $0x18] sm:$0xff]
        %v290 = vld [vmem:[%s285 + $0x20] sm:$0xff]
        %v291 = vld [vmem:[%s285 + $0x28] sm:$0xff]
        %v292 = vld [vmem:[%s285 + $0x30] sm:$0xff]
        %v293 = vld [vmem:[%s285 + $0x38] sm:$0xff]
        %v294 = vld [vmem:[%s285 + $0x40] sm:$0xff]
        %v295 = vld [vmem:[%s285 + $0x48] sm:$0xff]
        %v296 = vld [vmem:[%s285 + $0x50] sm:$0xff]
        %v297 = vld [vmem:[%s285 + $0x58] sm:$0xff]
        %v298 = vld [vmem:[%s285 + $0x60] sm:$0xff]
        %v299 = vld [vmem:[%s285 + $0x68] sm:$0xff]
        %v300 = vld [vmem:[%s285 + $0x70] sm:$0xff]
        %v301 = vld [vmem:[%s285 + $0x78] sm:$0xff]
        %302 = vmatpush.msra.mxu0 %v301
        %303 = vmatpush.msra.mxu0 %v300
        %304 = vmatpush.msra.mxu0 %v299
        %305 = vmatpush.msra.mxu0 %v298
        %306 = vmatpush.msra.mxu0 %v297
        %307 = vmatpush.msra.mxu0 %v296
        %308 = vmatpush.msra.mxu0 %v295
        %309 = vmatpush.msra.mxu0 %v294
        %310 = vmatpush.msra.mxu0 %v293
        %311 = vmatpush.msra.mxu0 %v292
        %312 = vmatpush.msra.mxu0 %v291
        %313 = vmatpush.msra.mxu0 %v290
        %314 = vmatpush.msra.mxu0 %v289
        %315 = vmatpush.msra.mxu0 %v288
        %316 = vmatpush.msra.mxu0 %v287
        %317 = vmatpush.msra.mxu0 %v286
        %318 = vmatmul.f32.gmra.mxu0 %v284
        %v319 = vpop.f32.mrf.mxu0
        %v320 = vadd.f32 0.0, %v319
        %321 = vdwg.mxu0
        %322 = vmatpush.msra.mxu0 %v278
        %323 = vmatpush.msra.mxu0 %v277
        %324 = vmatpush.msra.mxu0 %v276
        %325 = vmatpush.msra.mxu0 %v275
        %326 = vmatpush.msra.mxu0 %v274
        %327 = vmatpush.msra.mxu0 %v273
        %328 = vmatpush.msra.mxu0 %v272
        %329 = vmatpush.msra.mxu0 %v271
        %330 = vmatpush.msra.mxu0 %v270
        %331 = vmatpush.msra.mxu0 %v269
        %332 = vmatpush.msra.mxu0 %v268
        %333 = vmatpush.msra.mxu0 %v267
        %334 = vmatpush.msra.mxu0 %v266
        %335 = vmatpush.msra.mxu0 %v265
        %336 = vmatpush.msra.mxu0 %v264
        %337 = vmatpush.msra.mxu0 %v263
        %338 = vmatmul.f32.gmra.mxu0 %v262
        %v339 = vpop.f32.mrf.mxu0
        %v340 = vadd.f32 %v320, %v339
        %341 = vdwg.mxu0
        %v342 = vld [vmem:[%s2] sm:$0x1]
        %v344 = vperm.slane %v342, 0
        %v346 = vadd.f32 %v340, %v344
        %v347 = vmax.f32 %v346, 0.0
        %v348 = vld [vmem:[#allocation5] sm:$0xff]
        %v349 = vld [vmem:[#allocation5 + $0x8] sm:$0xff]
        %v350 = vld [vmem:[#allocation5 + $0x10] sm:$0xff]
        %v351 = vld [vmem:[#allocation5 + $0x18] sm:$0xff]
        %v352 = vld [vmem:[#allocation5 + $0x20] sm:$0xff]
        %v353 = vld [vmem:[#allocation5 + $0x28] sm:$0xff]
        %v354 = vld [vmem:[#allocation5 + $0x30] sm:$0xff]
        %v355 = vld [vmem:[#allocation5 + $0x38] sm:$0xff]
        %v356 = vld [vmem:[#allocation5 + $0x40] sm:$0xff]
        %v357 = vld [vmem:[#allocation5 + $0x48] sm:$0xff]
        %v358 = vld [vmem:[#allocation5 + $0x50] sm:$0xff]
        %v359 = vld [vmem:[#allocation5 + $0x58] sm:$0xff]
        %v360 = vld [vmem:[#allocation5 + $0x60] sm:$0xff]
        %v361 = vld [vmem:[#allocation5 + $0x68] sm:$0xff]
        %v362 = vld [vmem:[#allocation5 + $0x70] sm:$0xff]
        %v363 = vld [vmem:[#allocation5 + $0x78] sm:$0xff]
        %v364 = vld [vmem:[%s4] sm:$0x1]
        %v366 = vperm.slane %v364, 0
        %368 = vmatpush.msra.mxu0 %v363
        %369 = vmatpush.msra.mxu0 %v362
        %370 = vmatpush.msra.mxu0 %v361
        %371 = vmatpush.msra.mxu0 %v360
        %372 = vmatpush.msra.mxu0 %v359
        %373 = vmatpush.msra.mxu0 %v358
        %374 = vmatpush.msra.mxu0 %v357
        %375 = vmatpush.msra.mxu0 %v356
        %376 = vmatpush.msra.mxu0 %v355
        %377 = vmatpush.msra.mxu0 %v354
        %378 = vmatpush.msra.mxu0 %v353
        %379 = vmatpush.msra.mxu0 %v352
        %380 = vmatpush.msra.mxu0 %v351
        %381 = vmatpush.msra.mxu0 %v350
        %382 = vmatpush.msra.mxu0 %v349
        %383 = vmatpush.msra.mxu0 %v348
        %384 = vmatmul.f32.gmra.mxu0 %v347
        %v385 = vpop.f32.mrf.mxu0
        %v386 = vadd.f32 %v366, %v385
        %387 = vdwg.mxu0
        %vm388 = vcmp.lt.s32.totalorder %v255, 20
        %v389 = vsel %vm388, 1, 0
        %vm390 = vcmp.eq.s32.totalorder %v389, 1
        %v391 = vsel %vm390, %v386, -1e+30
        %392 = vmax.xlane.f32.xlu0 %v391
        %v393 = vpop.xlane.xlu0 %392
        %v394 = vsub.f32 %v391, %v393
        %v395 = vmul.f32 %v394, 1.442695
        %v396 = vpow.pop %v395
        %397 = vadd.xlane.f32.xlu0 %v396
        %v398 = vpop.xlane.xlu0 %397
        %v399 = vlog2.pop %v398
        %v400 = vmul.f32 %v399, 0.6931472
        %v401 = vsub.f32 %v394, %v400
        %402 = vst [vmem:[%s249] sm:$0xff] %v401
        %s403 = sand.u32 %s139, 1
        %s404 = scalar_lea.sflag [#allocation4], %s403
        %s405 = sand.u32 %s139, 1
        %s406 = smul.addr %s405, 8
        %s407 = scalar_lea.vmem [#allocation7], %s406
        // Predicated region
        $region49: #{tpu_custom_call.1} parent=39 // pred_check
          %p408 = pneg %p149
        $region50: #{tpu_custom_call.1} parent=39 // pred_check_branch
          %410 = sbr.rel (%p408) target = $region52
        $region51: #{tpu_custom_call.1} parent=39 // pred_region
          %412 = vsyncadd %s404, 0
          %s413 = smul.addr %s21, 8
          %s414 = scalar_lea.hbm %s5, %s413
          %s416 = sshll.u32 %s407, 4
          %s417 = int_to_ptr.vmem [resolvable:$true] %s416
          %s418 = sshll.u32 %s414, 4
          %s419 = int_to_ptr.hbm [resolvable:$true] %s418
          %421 = dma.vmem_to_hbm [thread:$0]  %s417, 128, %s419, %s404
        $region52: #{tpu_custom_call.1} parent=39 // pred_fallthru
          _
      $region40: #{tpu_custom_call.1} parent=5 // pred_fallthru
        _
      %p422 = scmp.le.s32.totalorder 2, %s16
      // Predicated region
      $region53: #{tpu_custom_call.1} parent=5 // pred_check
        %p423 = pneg %p422
      $region54: #{tpu_custom_call.1} parent=5 // pred_check_branch
        %425 = sbr.rel (%p423) target = $region56
      $region55: #{tpu_custom_call.1} parent=5 // pred_region
        %s426 = ssub.s32 %s16, 2
        // Predicated region
        $region57: #{tpu_custom_call.1} parent=55 // pred_check
          %p427 = pneg %p155
        $region58: #{tpu_custom_call.1} parent=55 // pred_check_branch
          %429 = sbr.rel (%p427) target = $region60
        $region59: #{tpu_custom_call.1} parent=55 // pred_region
          %s430 = sand.u32 %s140, 1
          %s431 = scalar_lea.sflag [#allocation4], %s430
          %s432 = sand.u32 %s140, 1
          %s433 = smul.addr %s432, 8
          %s434 = scalar_lea.vmem [#allocation7], %s433
          %436 = dma.done %s431, 128
        $region60: #{tpu_custom_call.1} parent=55 // pred_fallthru
          _
      $region56: #{tpu_custom_call.1} parent=5 // pred_fallthru
        _
    $region6: #{tpu_custom_call.1} parent=1 // loop_footer
      %s20 = sadd.s32 1, %s16
    $region7: #{tpu_custom_call.1} parent=1 // loop_footer_branch
      %15 = sbr.rel target = $region3
    $region8: #{tpu_custom_call.1} parent=1 // loop_exit
      _
    %437 = vsyncpa [#allocation3], 1
    %s438 = scalar_lea.sflag [#allocation3], 1
    %439 = vsyncpa %s438, 1
    %440 = vsyncpa [#allocation6], 1
    %441 = vsyncpa [#allocation4], 1
    %s442 = scalar_lea.sflag [#allocation4], 1
    %443 = vsyncpa %s442, 1

</llo_original>
